<compile_context>
chip_gen: v5e
topology: v5e:2x2
jax: 0.10.0
libtpu: 0.0.40
codegen_flags: <defaults>
</compile_context>

<pallas_src>
import numpy as np
import jax
import jax.numpy as jnp
from jax import lax
from jax.experimental import pallas as pl
from jax.experimental.pallas import tpu as pltpu


def _bilinear_matrix(out_size: int, in_size: int) -> np.ndarray:
    """Interpolation matrix R s.t. R @ x == 1-D bilinear resize, align_corners=True."""
    R = np.zeros((out_size, in_size), dtype=np.float32)
    scale = 0.0 if out_size == 1 else (in_size - 1) / (out_size - 1)
    for i in range(out_size):
        src = i * scale
        i0 = min(int(np.floor(src)), in_size - 1)
        i1 = min(i0 + 1, in_size - 1)
        w1 = np.float32(src - i0)
        R[i, i0] += np.float32(1.0) - w1
        R[i, i1] += w1
    return R


def _make_kernel(channels, batch):
    """Kernel for one batch element (one grid step) over all pyramid levels.

    Refs (in order): [feat_0 (C0,S0), dmask_0 (1,S0), feat_1, dmask_1, ...,
                      out (8,128)].
    """
    inv_bc = [np.float32(1.0 / (batch * c)) for c in channels]

    def kernel(*refs):
        out_ref = refs[-1]                               # (8, 128) partial-loss tile
        total = jnp.zeros((), jnp.float32)
        for lvl in range(len(channels)):
            feat = refs[2 * lvl][...]                    # (C_l, H_l*W_l), native dtype
            dmask = refs[2 * lvl + 1][...]               # (1,   H_l*W_l), f32
            if dmask.dtype != feat.dtype:                # no-op for f32 features
                dmask = dmask.astype(feat.dtype)
            # obj_mean - bg_mean for every channel of this batch element:
            # one MXU matmul contracting H*W; output (1, C) is lane-dense.
            diffs = lax.dot_general(
                dmask, feat,
                dimension_numbers=(((1,), (1,)), ((), ())),
                preferred_element_type=jnp.float32)      # (1, C_l)
            total = total + jnp.sum(diffs * diffs) * inv_bc[lvl]
        out_ref[...] = jnp.full(out_ref.shape, total, dtype=out_ref.dtype)

    return kernel


def _padded_vmem_bytes(shape, dtype):
    """Rough VMEM footprint of one block after (8,128) tiling padding."""
    dims = list(shape)
    dims[-1] = -(-dims[-1] // 128) * 128
    if len(dims) >= 2:
        dims[-2] = -(-dims[-2] // 8) * 8
    n = 1
    for d in dims:
        n *= int(d)
    return n * np.dtype(dtype).itemsize


def pvt_perceptual_loss(pvt_features, object_mask, background_mask):
    """Pallas implementation of PVTPerceptualLoss.forward (single fused kernel)."""
    B = object_mask.shape[0]
    H0, W0 = object_mask.shape[2], object_mask.shape[3]
    om = object_mask[:, 0].astype(jnp.float32)           # (B, H0, W0)
    bm = background_mask[:, 0].astype(jnp.float32)

    inputs, in_specs, channels = [], [], []
    block_bytes = 0
    for feat in pvt_features:
        Bf, C, H, W = feat.shape
        assert Bf == B
        channels.append(C)
        S = H * W

        # Separable align_corners=True bilinear resize of the (tiny) masks,
        # done once in the wrapper — the kron operand is eliminated.
        rh = jnp.asarray(_bilinear_matrix(H, H0))        # (H, H0)
        rw = jnp.asarray(_bilinear_matrix(W, W0))        # (W, W0)
        om_r = jnp.einsum("hi,bij,wj->bhw", rh, om, rw).reshape(B, S)
        bm_r = jnp.einsum("hi,bij,wj->bhw", rh, bm, rw).reshape(B, S)
        # Fold 1/(mask_sum + eps) and the obj - bg subtraction into one mask:
        #   obj_mean - bg_mean == feat @ dmask   (per batch, per channel).
        dmask = (om_r / (om_r.sum(-1, keepdims=True) + 1e-8)
                 - bm_r / (bm_r.sum(-1, keepdims=True) + 1e-8))   # (B, S)
        dmask = dmask.reshape(B, 1, S)

        feat_flat = feat.reshape(B, C, S)                # metadata reshape, native dtype
        inputs += [feat_flat, dmask]
        in_specs += [
            pl.BlockSpec((None, C, S), lambda b: (b, 0, 0)),
            pl.BlockSpec((None, 1, S), lambda b: (b, 0, 0)),
        ]
        block_bytes += _padded_vmem_bytes((C, S), feat.dtype)
        block_bytes += _padded_vmem_bytes((1, S), jnp.float32)

    out_block = (8, 128)
    block_bytes += _padded_vmem_bytes(out_block, jnp.float32)
    # Double-buffered pipeline + headroom; explicit so v5e's 16 MiB scoped
    # default vs v6e/v7x's 32 MiB never silently differs.
    vmem_limit = int(min(100 * 2**20, max(8 * 2**20, 4 * block_bytes)))

    out = pl.pallas_call(
        _make_kernel(tuple(channels), B),
        out_shape=jax.ShapeDtypeStruct((B,) + out_block, jnp.float32),
        grid=(B,),
        in_specs=in_specs,
        out_specs=pl.BlockSpec((None,) + out_block, lambda b: (b, 0, 0)),
        compiler_params=pltpu.CompilerParams(
            dimension_semantics=("parallel",),
            vmem_limit_bytes=vmem_limit),
    )(*inputs)

    # Per-batch partial losses already carry the 1/(B*C) MSE normalisation,
    # so the total loss is just their sum (B scalars).
    return jnp.sum(out[:, 0, 0])


def _reference_loss(pvt_features, object_mask, background_mask):
    """Pure-JAX reference matching the PyTorch semantics."""
    total = jnp.float32(0.0)
    H0, W0 = object_mask.shape[2:]
    for feat in pvt_features:
        _, _, H, W = feat.shape
        rh = jnp.asarray(_bilinear_matrix(H, H0))
        rw = jnp.asarray(_bilinear_matrix(W, W0))
        om = jnp.einsum("hi,bij,wj->bhw", rh,
                        object_mask[:, 0].astype(jnp.float32), rw)
        bm = jnp.einsum("hi,bij,wj->bhw", rh,
                        background_mask[:, 0].astype(jnp.float32), rw)
        f = feat.astype(jnp.float32)
        obj_mean = jnp.sum(f * om[:, None], axis=(2, 3)) / (
            jnp.sum(om, axis=(1, 2))[:, None] + 1e-8)
        bg_mean = jnp.sum(f * bm[:, None], axis=(2, 3)) / (
            jnp.sum(bm, axis=(1, 2))[:, None] + 1e-8)
        total = total + jnp.mean((obj_mean - bg_mean) ** 2)
    return total


if __name__ == "__main__":
    key = jax.random.PRNGKey(0)
    k1, k2, k3, k4, k5 = jax.random.split(key, 5)

    B = 2
    # masks at full resolution (B, 1, 32, 32)
    object_mask = jax.random.uniform(k5, (B, 1, 32, 32), dtype=jnp.float32)
    background_mask = 1.0 - object_mask

    # synthetic PVT pyramid features [fb1, fb2, fb3, fb4] (NCHW)
    pvt_features = [
        jax.random.normal(k1, (B, 16, 16, 16), dtype=jnp.float32),
        jax.random.normal(k2, (B, 32, 8, 8), dtype=jnp.float32),
        jax.random.normal(k3, (B, 64, 4, 4), dtype=jnp.float32),
        jax.random.normal(k4, (B, 128, 2, 2), dtype=jnp.float32),
    ]

    loss = pvt_perceptual_loss(pvt_features, object_mask, background_mask)
    loss = jax.block_until_ready(loss)

    ref = _reference_loss(pvt_features, object_mask, background_mask)
    np.testing.assert_allclose(np.asarray(loss), np.asarray(ref),
                               rtol=1e-3, atol=1e-5)
    print("KERNEL_OK")
</pallas_src>

<mosaic_0001>
module attributes {stable_mosaic.version = 11 : i64} {
  func.func @kernel(%arg0: i32, %arg1: memref<1x16x256xf32, #tpu.memory_space<vmem>>, %arg2: memref<1x1x256xf32, #tpu.memory_space<vmem>>, %arg3: memref<1x32x64xf32, #tpu.memory_space<vmem>>, %arg4: memref<1x1x64xf32, #tpu.memory_space<vmem>>, %arg5: memref<1x64x16xf32, #tpu.memory_space<vmem>>, %arg6: memref<1x1x16xf32, #tpu.memory_space<vmem>>, %arg7: memref<1x128x4xf32, #tpu.memory_space<vmem>>, %arg8: memref<1x1x4xf32, #tpu.memory_space<vmem>>, %arg9: memref<1x8x128xf32, #tpu.memory_space<vmem>>) attributes {dimension_semantics = [#tpu.dimension_semantics<parallel>], iteration_bounds = array<i64: 2>, scalar_prefetch = 0 : i64, scratch_operands = 0 : i64, tpu.core_type = #tpu.core_type<tc>, window_params = [{transform_indices = @transform_0, window_bounds = array<i64: 1, 16, 256>}, {transform_indices = @transform_1, window_bounds = array<i64: 1, 1, 256>}, {transform_indices = @transform_2, window_bounds = array<i64: 1, 32, 64>}, {transform_indices = @transform_3, window_bounds = array<i64: 1, 1, 64>}, {transform_indices = @transform_4, window_bounds = array<i64: 1, 64, 16>}, {transform_indices = @transform_5, window_bounds = array<i64: 1, 1, 16>}, {transform_indices = @transform_6, window_bounds = array<i64: 1, 128, 4>}, {transform_indices = @transform_7, window_bounds = array<i64: 1, 1, 4>}, {transform_indices = @transform_8, window_bounds = array<i64: 1, 8, 128>}]} {
    %c0 = arith.constant 0 : index
    %c0_0 = arith.constant 0 : index
    %c0_1 = arith.constant 0 : index
    %0 = vector.load %arg1[%c0, %c0_0, %c0_1] : memref<1x16x256xf32, #tpu.memory_space<vmem>>, vector<1x16x256xf32>
    %1 = vector.shape_cast %0 : vector<1x16x256xf32> to vector<16x256xf32>
    %c0_2 = arith.constant 0 : index
    %c0_3 = arith.constant 0 : index
    %c0_4 = arith.constant 0 : index
    %2 = vector.load %arg2[%c0_2, %c0_3, %c0_4] : memref<1x1x256xf32, #tpu.memory_space<vmem>>, vector<1x1x256xf32>
    %3 = vector.shape_cast %2 : vector<1x1x256xf32> to vector<1x256xf32>
    %cst = arith.constant dense<0.000000e+00> : vector<1x16xf32>
    %4 = tpu.matmul %3, %1, %cst {dimension_numbers = #tpu.dot_dimension_numbers<[1], [1], [0], [0], [0, 0, 1, 0], [], []>} : vector<1x256xf32>, vector<16x256xf32>, vector<1x16xf32> -> vector<1x16xf32>
    %5 = arith.mulf %4, %4 : vector<1x16xf32>
    %6 = vector.shape_cast %5 : vector<1x16xf32> to vector<1x1x16xf32>
    %cst_5 = arith.constant dense<0.000000e+00> : vector<1xf32>
    %7 = vector.multi_reduction <add>, %6, %cst_5 [1, 2] : vector<1x1x16xf32> to vector<1xf32>
    %8 = vector.shape_cast %7 : vector<1xf32> to vector<1x1x1xf32>
    %9 = vector.extract %8[0, 0, 0] : f32 from vector<1x1x1xf32>
    %cst_6 = arith.constant 3.125000e-02 : f32
    %10 = arith.mulf %9, %cst_6 : f32
    %cst_7 = arith.constant 0.000000e+00 : f32
    %11 = arith.addf %cst_7, %10 : f32
    %c0_8 = arith.constant 0 : index
    %c0_9 = arith.constant 0 : index
    %c0_10 = arith.constant 0 : index
    %12 = vector.load %arg3[%c0_8, %c0_9, %c0_10] : memref<1x32x64xf32, #tpu.memory_space<vmem>>, vector<1x32x64xf32>
    %13 = vector.shape_cast %12 : vector<1x32x64xf32> to vector<32x64xf32>
    %c0_11 = arith.constant 0 : index
    %c0_12 = arith.constant 0 : index
    %c0_13 = arith.constant 0 : index
    %14 = vector.load %arg4[%c0_11, %c0_12, %c0_13] : memref<1x1x64xf32, #tpu.memory_space<vmem>>, vector<1x1x64xf32>
    %15 = vector.shape_cast %14 : vector<1x1x64xf32> to vector<1x64xf32>
    %cst_14 = arith.constant dense<0.000000e+00> : vector<1x32xf32>
    %16 = tpu.matmul %15, %13, %cst_14 {dimension_numbers = #tpu.dot_dimension_numbers<[1], [1], [0], [0], [0, 0, 1, 0], [], []>} : vector<1x64xf32>, vector<32x64xf32>, vector<1x32xf32> -> vector<1x32xf32>
    %17 = arith.mulf %16, %16 : vector<1x32xf32>
    %18 = vector.shape_cast %17 : vector<1x32xf32> to vector<1x1x32xf32>
    %cst_15 = arith.constant dense<0.000000e+00> : vector<1xf32>
    %19 = vector.multi_reduction <add>, %18, %cst_15 [1, 2] : vector<1x1x32xf32> to vector<1xf32>
    %20 = vector.shape_cast %19 : vector<1xf32> to vector<1x1x1xf32>
    %21 = vector.extract %20[0, 0, 0] : f32 from vector<1x1x1xf32>
    %cst_16 = arith.constant 1.562500e-02 : f32
    %22 = arith.mulf %21, %cst_16 : f32
    %23 = arith.addf %11, %22 : f32
    %c0_17 = arith.constant 0 : index
    %c0_18 = arith.constant 0 : index
    %c0_19 = arith.constant 0 : index
    %24 = vector.load %arg5[%c0_17, %c0_18, %c0_19] : memref<1x64x16xf32, #tpu.memory_space<vmem>>, vector<1x64x16xf32>
    %25 = vector.shape_cast %24 : vector<1x64x16xf32> to vector<64x16xf32>
    %c0_20 = arith.constant 0 : index
    %c0_21 = arith.constant 0 : index
    %c0_22 = arith.constant 0 : index
    %26 = vector.load %arg6[%c0_20, %c0_21, %c0_22] : memref<1x1x16xf32, #tpu.memory_space<vmem>>, vector<1x1x16xf32>
    %27 = vector.shape_cast %26 : vector<1x1x16xf32> to vector<1x16xf32>
    %cst_23 = arith.constant dense<0.000000e+00> : vector<1x64xf32>
    %28 = tpu.matmul %27, %25, %cst_23 {dimension_numbers = #tpu.dot_dimension_numbers<[1], [1], [0], [0], [0, 0, 1, 0], [], []>} : vector<1x16xf32>, vector<64x16xf32>, vector<1x64xf32> -> vector<1x64xf32>
    %29 = arith.mulf %28, %28 : vector<1x64xf32>
    %30 = vector.shape_cast %29 : vector<1x64xf32> to vector<1x1x64xf32>
    %cst_24 = arith.constant dense<0.000000e+00> : vector<1xf32>
    %31 = vector.multi_reduction <add>, %30, %cst_24 [1, 2] : vector<1x1x64xf32> to vector<1xf32>
    %32 = vector.shape_cast %31 : vector<1xf32> to vector<1x1x1xf32>
    %33 = vector.extract %32[0, 0, 0] : f32 from vector<1x1x1xf32>
    %cst_25 = arith.constant 7.812500e-03 : f32
    %34 = arith.mulf %33, %cst_25 : f32
    %35 = arith.addf %23, %34 : f32
    %c0_26 = arith.constant 0 : index
    %c0_27 = arith.constant 0 : index
    %c0_28 = arith.constant 0 : index
    %36 = vector.load %arg7[%c0_26, %c0_27, %c0_28] : memref<1x128x4xf32, #tpu.memory_space<vmem>>, vector<1x128x4xf32>
    %37 = vector.shape_cast %36 : vector<1x128x4xf32> to vector<128x4xf32>
    %c0_29 = arith.constant 0 : index
    %c0_30 = arith.constant 0 : index
    %c0_31 = arith.constant 0 : index
    %38 = vector.load %arg8[%c0_29, %c0_30, %c0_31] : memref<1x1x4xf32, #tpu.memory_space<vmem>>, vector<1x1x4xf32>
    %39 = vector.shape_cast %38 : vector<1x1x4xf32> to vector<1x4xf32>
    %cst_32 = arith.constant dense<0.000000e+00> : vector<1x128xf32>
    %40 = tpu.matmul %39, %37, %cst_32 {dimension_numbers = #tpu.dot_dimension_numbers<[1], [1], [0], [0], [0, 0, 1, 0], [], []>} : vector<1x4xf32>, vector<128x4xf32>, vector<1x128xf32> -> vector<1x128xf32>
    %41 = arith.mulf %40, %40 : vector<1x128xf32>
    %42 = vector.shape_cast %41 : vector<1x128xf32> to vector<1x1x128xf32>
    %cst_33 = arith.constant dense<0.000000e+00> : vector<1xf32>
    %43 = vector.multi_reduction <add>, %42, %cst_33 [1, 2] : vector<1x1x128xf32> to vector<1xf32>
    %44 = vector.shape_cast %43 : vector<1xf32> to vector<1x1x1xf32>
    %45 = vector.extract %44[0, 0, 0] : f32 from vector<1x1x1xf32>
    %cst_34 = arith.constant 3.906250e-03 : f32
    %46 = arith.mulf %45, %cst_34 : f32
    %47 = arith.addf %35, %46 : f32
    %48 = vector.broadcast %47 : f32 to vector<8x128xf32>
    %c0_35 = arith.constant 0 : index
    %c0_36 = arith.constant 0 : index
    %c0_37 = arith.constant 0 : index
    %49 = vector.load %arg9[%c0_35, %c0_36, %c0_37] : memref<1x8x128xf32, #tpu.memory_space<vmem>>, vector<1x8x128xf32>
    %50 = vector.shape_cast %49 : vector<1x8x128xf32> to vector<8x128xf32>
    %51 = vector.shape_cast %48 : vector<8x128xf32> to vector<1x8x128xf32>
    tpu.vector_store %arg9[%c0_35, %c0_36, %c0_37], %51 {strides = array<i32>} : memref<1x8x128xf32, #tpu.memory_space<vmem>>, vector<1x8x128xf32>,
    return
  }
  func.func @transform_0(%arg0: i32) -> (i32, i32, i32) {
    %c0_i32 = arith.constant 0 : i32
    %c0_i32_0 = arith.constant 0 : i32
    %c0_i32_1 = arith.constant 0 : i32
    return %arg0, %c0_i32, %c0_i32_0 : i32, i32, i32
  }
  func.func @transform_1(%arg0: i32) -> (i32, i32, i32) {
    %c0_i32 = arith.constant 0 : i32
    %c0_i32_0 = arith.constant 0 : i32
    %c0_i32_1 = arith.constant 0 : i32
    return %arg0, %c0_i32, %c0_i32_0 : i32, i32, i32
  }
  func.func @transform_2(%arg0: i32) -> (i32, i32, i32) {
    %c0_i32 = arith.constant 0 : i32
    %c0_i32_0 = arith.constant 0 : i32
    %c0_i32_1 = arith.constant 0 : i32
    return %arg0, %c0_i32, %c0_i32_0 : i32, i32, i32
  }
  func.func @transform_3(%arg0: i32) -> (i32, i32, i32) {
    %c0_i32 = arith.constant 0 : i32
    %c0_i32_0 = arith.constant 0 : i32
    %c0_i32_1 = arith.constant 0 : i32
    return %arg0, %c0_i32, %c0_i32_0 : i32, i32, i32
  }
  func.func @transform_4(%arg0: i32) -> (i32, i32, i32) {
    %c0_i32 = arith.constant 0 : i32
    %c0_i32_0 = arith.constant 0 : i32
    %c0_i32_1 = arith.constant 0 : i32
    return %arg0, %c0_i32, %c0_i32_0 : i32, i32, i32
  }
  func.func @transform_5(%arg0: i32) -> (i32, i32, i32) {
    %c0_i32 = arith.constant 0 : i32
    %c0_i32_0 = arith.constant 0 : i32
    %c0_i32_1 = arith.constant 0 : i32
    return %arg0, %c0_i32, %c0_i32_0 : i32, i32, i32
  }
  func.func @transform_6(%arg0: i32) -> (i32, i32, i32) {
    %c0_i32 = arith.constant 0 : i32
    %c0_i32_0 = arith.constant 0 : i32
    %c0_i32_1 = arith.constant 0 : i32
    return %arg0, %c0_i32, %c0_i32_0 : i32, i32, i32
  }
  func.func @transform_7(%arg0: i32) -> (i32, i32, i32) {
    %c0_i32 = arith.constant 0 : i32
    %c0_i32_0 = arith.constant 0 : i32
    %c0_i32_1 = arith.constant 0 : i32
    return %arg0, %c0_i32, %c0_i32_0 : i32, i32, i32
  }
  func.func @transform_8(%arg0: i32) -> (i32, i32, i32) {
    %c0_i32 = arith.constant 0 : i32
    %c0_i32_0 = arith.constant 0 : i32
    %c0_i32_1 = arith.constant 0 : i32
    return %arg0, %c0_i32, %c0_i32_0 : i32, i32, i32
  }
}

</mosaic_0001>

<llo_original>
// kernel: tpu_custom_call.1
$region0: #{tpu_custom_call.1}
  #allocation0 [shape = 'u32[]', space=smem, size = 0x4, offset = 0x4, fixed_abs, tag = 'smem constant byte address 0x4 - core index']
  #allocation1 [shape = 'u32[72,128]{1,0:T(1,128)}', space=vmem, size = 0x9000, scoped, tag = 'internal scratch']
  %s0 = inlined_call_operand.vmem [shape: f32[2,16,256], index: 0, kind: input, shape index: {}]
  %s1 = inlined_call_operand.vmem [shape: f32[2,1,256], index: 1, kind: input, shape index: {}]
  %s2 = inlined_call_operand.vmem [shape: f32[2,32,64], index: 2, kind: input, shape index: {}]
  %s3 = inlined_call_operand.vmem [shape: f32[2,1,64], index: 3, kind: input, shape index: {}]
  %s4 = inlined_call_operand.vmem [shape: f32[2,64,16], index: 4, kind: input, shape index: {}]
  %s5 = inlined_call_operand.vmem [shape: f32[2,1,16], index: 5, kind: input, shape index: {}]
  %s6 = inlined_call_operand.vmem [shape: f32[2,128,4], index: 6, kind: input, shape index: {}]
  %s7 = inlined_call_operand.vmem [shape: f32[2,1,4], index: 7, kind: input, shape index: {}]
  %s8 = inlined_call_operand.hbm [shape: f32[2,8,128], index: 8, kind: output, shape index: {}]
  %s9 = sld [smem:[#allocation0]]
  $region65: #{tpu_custom_call.1} parent=0
    _
  %s11 = ssub.s32 1, %s9
  %s12 = scalar_select 0, %s11, %s9
  $region1: #{tpu_custom_call.1} parent=0
    #allocation2 [shape = 'u8[8192]{0}', space=vmem, size = 0x2000, scoped, tag = 'output window, operand 0']
    #allocation3 [shape = 's32[2]{0}', space=sflag, size = 0x8, scoped, tag = 'scoped memory for tpu_custom_call.1']
    %13 = vsyncpa [#allocation3], 0
    %s14 = scalar_lea.sflag [#allocation3], 1
    %15 = vsyncpa %s14, 0
    loop: start=0, step=1, limit=4
    $region2: #{tpu_custom_call.1} parent=1 // loop_pre_header
      _
    $region3: #{tpu_custom_call.1} parent=1 // loop_header
      %s17 = sphi 0, %s21
      %p18 = scmp.ge.s32.totalorder %s17, 4
      %s27 = sphi 0, %s29
      %s30 = sphi 0, %s27
      %s31 = sphi 0, %s30
      %s47 = sphi 0, %s31
      %s53 = sphi 0, %s55
      %s56 = sphi 0, %s53
      %s57 = sphi 0, %s56
      %s73 = sphi 0, %s57
      %s79 = sphi 0, %s81
      %s82 = sphi 0, %s79
      %s83 = sphi 0, %s82
      %s99 = sphi 0, %s83
      %s105 = sphi 0, %s107
      %s108 = sphi 0, %s105
      %s109 = sphi 0, %s108
      %s125 = sphi 0, %s109
      %s131 = sphi 0, %s133
      %s134 = sphi 0, %s131
      %s135 = sphi 0, %s134
      %s151 = sphi 0, %s135
      %s157 = sphi 0, %s159
      %s160 = sphi 0, %s157
      %s161 = sphi 0, %s160
      %s177 = sphi 0, %s161
      %s183 = sphi 0, %s185
      %s186 = sphi 0, %s183
      %s187 = sphi 0, %s186
      %s203 = sphi 0, %s187
      %s209 = sphi 0, %s211
      %s212 = sphi 0, %s209
      %s213 = sphi 0, %s212
      %s229 = sphi 0, %s213
      %s235 = sphi 0, %s237
      %s238 = sphi 0, %s235
      %s239 = sphi 0, %s238
      %s255 = sphi 0, %s239
    $region4: #{tpu_custom_call.1} parent=1 // loop_header_branch
      %20 = sbr.rel (%p18) target = $region8
    $region5: #{tpu_custom_call.1} parent=1 // loop_body
      %s22 = ssub.s32 %s17, 1
      %s23 = ssub.s32 %s17, 2
      %s24 = sadd.s32 %s17, 1
      %s25 = ssub.s32 %s17, %s24
      %p26 = scmp.eq.s32.totalorder %s25, 0
      %s28 = sadd.s32 %s27, 1
      %s29 = scalar_select %p26, %s27, %s28
      %p32 = pneg %p26
      %p33 = scmp.eq.s32.totalorder %s17, 1
      %p34 = por %p32, %p33
      %p35 = scmp.ne.s32.totalorder %s27, %s30
      %p36 = scmp.eq.s32.totalorder %s17, 0
      %p37 = por %p35, %p36
      %p38 = scmp.ne.s32.totalorder %s27, %s30
      %p39 = scmp.eq.s32.totalorder %s22, 1
      %p40 = por %p38, %p39
      %p41 = scmp.ne.s32.totalorder %s30, %s31
      %p42 = scmp.eq.s32.totalorder %s22, 0
      %p43 = por %p41, %p42
      %p44 = scmp.ne.s32.totalorder %s30, %s31
      %p45 = scmp.eq.s32.totalorder %s23, 1
      %p46 = por %p44, %p45
      %p48 = scmp.ne.s32.totalorder %s31, %s47
      %p49 = scmp.eq.s32.totalorder %s23, 0
      %p50 = por %p48, %p49
      %s51 = ssub.s32 %s17, %s24
      %p52 = scmp.eq.s32.totalorder %s51, 0
      %s54 = sadd.s32 %s53, 1
      %s55 = scalar_select %p52, %s53, %s54
      %p58 = pneg %p52
      %p59 = scmp.eq.s32.totalorder %s17, 1
      %p60 = por %p58, %p59
      %p61 = scmp.ne.s32.totalorder %s53, %s56
      %p62 = scmp.eq.s32.totalorder %s17, 0
      %p63 = por %p61, %p62
      %p64 = scmp.ne.s32.totalorder %s53, %s56
      %p65 = scmp.eq.s32.totalorder %s22, 1
      %p66 = por %p64, %p65
      %p67 = scmp.ne.s32.totalorder %s56, %s57
      %p68 = scmp.eq.s32.totalorder %s22, 0
      %p69 = por %p67, %p68
      %p70 = scmp.ne.s32.totalorder %s56, %s57
      %p71 = scmp.eq.s32.totalorder %s23, 1
      %p72 = por %p70, %p71
      %p74 = scmp.ne.s32.totalorder %s57, %s73
      %p75 = scmp.eq.s32.totalorder %s23, 0
      %p76 = por %p74, %p75
      %s77 = ssub.s32 %s17, %s24
      %p78 = scmp.eq.s32.totalorder %s77, 0
      %s80 = sadd.s32 %s79, 1
      %s81 = scalar_select %p78, %s79, %s80
      %p84 = pneg %p78
      %p85 = scmp.eq.s32.totalorder %s17, 1
      %p86 = por %p84, %p85
      %p87 = scmp.ne.s32.totalorder %s79, %s82
      %p88 = scmp.eq.s32.totalorder %s17, 0
      %p89 = por %p87, %p88
      %p90 = scmp.ne.s32.totalorder %s79, %s82
      %p91 = scmp.eq.s32.totalorder %s22, 1
      %p92 = por %p90, %p91
      %p93 = scmp.ne.s32.totalorder %s82, %s83
      %p94 = scmp.eq.s32.totalorder %s22, 0
      %p95 = por %p93, %p94
      %p96 = scmp.ne.s32.totalorder %s82, %s83
      %p97 = scmp.eq.s32.totalorder %s23, 1
      %p98 = por %p96, %p97
      %p100 = scmp.ne.s32.totalorder %s83, %s99
      %p101 = scmp.eq.s32.totalorder %s23, 0
      %p102 = por %p100, %p101
      %s103 = ssub.s32 %s17, %s24
      %p104 = scmp.eq.s32.totalorder %s103, 0
      %s106 = sadd.s32 %s105, 1
      %s107 = scalar_select %p104, %s105, %s106
      %p110 = pneg %p104
      %p111 = scmp.eq.s32.totalorder %s17, 1
      %p112 = por %p110, %p111
      %p113 = scmp.ne.s32.totalorder %s105, %s108
      %p114 = scmp.eq.s32.totalorder %s17, 0
      %p115 = por %p113, %p114
      %p116 = scmp.ne.s32.totalorder %s105, %s108
      %p117 = scmp.eq.s32.totalorder %s22, 1
      %p118 = por %p116, %p117
      %p119 = scmp.ne.s32.totalorder %s108, %s109
      %p120 = scmp.eq.s32.totalorder %s22, 0
      %p121 = por %p119, %p120
      %p122 = scmp.ne.s32.totalorder %s108, %s109
      %p123 = scmp.eq.s32.totalorder %s23, 1
      %p124 = por %p122, %p123
      %p126 = scmp.ne.s32.totalorder %s109, %s125
      %p127 = scmp.eq.s32.totalorder %s23, 0
      %p128 = por %p126, %p127
      %s129 = ssub.s32 %s17, %s24
      %p130 = scmp.eq.s32.totalorder %s129, 0
      %s132 = sadd.s32 %s131, 1
      %s133 = scalar_select %p130, %s131, %s132
      %p136 = pneg %p130
      %p137 = scmp.eq.s32.totalorder %s17, 1
      %p138 = por %p136, %p137
      %p139 = scmp.ne.s32.totalorder %s131, %s134
      %p140 = scmp.eq.s32.totalorder %s17, 0
      %p141 = por %p139, %p140
      %p142 = scmp.ne.s32.totalorder %s131, %s134
      %p143 = scmp.eq.s32.totalorder %s22, 1
      %p144 = por %p142, %p143
      %p145 = scmp.ne.s32.totalorder %s134, %s135
      %p146 = scmp.eq.s32.totalorder %s22, 0
      %p147 = por %p145, %p146
      %p148 = scmp.ne.s32.totalorder %s134, %s135
      %p149 = scmp.eq.s32.totalorder %s23, 1
      %p150 = por %p148, %p149
      %p152 = scmp.ne.s32.totalorder %s135, %s151
      %p153 = scmp.eq.s32.totalorder %s23, 0
      %p154 = por %p152, %p153
      %s155 = ssub.s32 %s17, %s24
      %p156 = scmp.eq.s32.totalorder %s155, 0
      %s158 = sadd.s32 %s157, 1
      %s159 = scalar_select %p156, %s157, %s158
      %p162 = pneg %p156
      %p163 = scmp.eq.s32.totalorder %s17, 1
      %p164 = por %p162, %p163
      %p165 = scmp.ne.s32.totalorder %s157, %s160
      %p166 = scmp.eq.s32.totalorder %s17, 0
      %p167 = por %p165, %p166
      %p168 = scmp.ne.s32.totalorder %s157, %s160
      %p169 = scmp.eq.s32.totalorder %s22, 1
      %p170 = por %p168, %p169
      %p171 = scmp.ne.s32.totalorder %s160, %s161
      %p172 = scmp.eq.s32.totalorder %s22, 0
      %p173 = por %p171, %p172
      %p174 = scmp.ne.s32.totalorder %s160, %s161
      %p175 = scmp.eq.s32.totalorder %s23, 1
      %p176 = por %p174, %p175
      %p178 = scmp.ne.s32.totalorder %s161, %s177
      %p179 = scmp.eq.s32.totalorder %s23, 0
      %p180 = por %p178, %p179
      %s181 = ssub.s32 %s17, %s24
      %p182 = scmp.eq.s32.totalorder %s181, 0
      %s184 = sadd.s32 %s183, 1
      %s185 = scalar_select %p182, %s183, %s184
      %p188 = pneg %p182
      %p189 = scmp.eq.s32.totalorder %s17, 1
      %p190 = por %p188, %p189
      %p191 = scmp.ne.s32.totalorder %s183, %s186
      %p192 = scmp.eq.s32.totalorder %s17, 0
      %p193 = por %p191, %p192
      %p194 = scmp.ne.s32.totalorder %s183, %s186
      %p195 = scmp.eq.s32.totalorder %s22, 1
      %p196 = por %p194, %p195
      %p197 = scmp.ne.s32.totalorder %s186, %s187
      %p198 = scmp.eq.s32.totalorder %s22, 0
      %p199 = por %p197, %p198
      %p200 = scmp.ne.s32.totalorder %s186, %s187
      %p201 = scmp.eq.s32.totalorder %s23, 1
      %p202 = por %p200, %p201
      %p204 = scmp.ne.s32.totalorder %s187, %s203
      %p205 = scmp.eq.s32.totalorder %s23, 0
      %p206 = por %p204, %p205
      %s207 = ssub.s32 %s17, %s24
      %p208 = scmp.eq.s32.totalorder %s207, 0
      %s210 = sadd.s32 %s209, 1
      %s211 = scalar_select %p208, %s209, %s210
      %p214 = pneg %p208
      %p215 = scmp.eq.s32.totalorder %s17, 1
      %p216 = por %p214, %p215
      %p217 = scmp.ne.s32.totalorder %s209, %s212
      %p218 = scmp.eq.s32.totalorder %s17, 0
      %p219 = por %p217, %p218
      %p220 = scmp.ne.s32.totalorder %s209, %s212
      %p221 = scmp.eq.s32.totalorder %s22, 1
      %p222 = por %p220, %p221
      %p223 = scmp.ne.s32.totalorder %s212, %s213
      %p224 = scmp.eq.s32.totalorder %s22, 0
      %p225 = por %p223, %p224
      %p226 = scmp.ne.s32.totalorder %s212, %s213
      %p227 = scmp.eq.s32.totalorder %s23, 1
      %p228 = por %p226, %p227
      %p230 = scmp.ne.s32.totalorder %s213, %s229
      %p231 = scmp.eq.s32.totalorder %s23, 0
      %p232 = por %p230, %p231
      %s233 = ssub.s32 %s17, %s24
      %p234 = scmp.eq.s32.totalorder %s233, 0
      %s236 = sadd.s32 %s235, 1
      %s237 = scalar_select %p234, %s235, %s236
      %p240 = pneg %p234
      %p241 = scmp.eq.s32.totalorder %s17, 1
      %p242 = por %p240, %p241
      %p243 = scmp.ne.s32.totalorder %s235, %s238
      %p244 = scmp.eq.s32.totalorder %s17, 0
      %p245 = por %p243, %p244
      %p246 = scmp.ne.s32.totalorder %s235, %s238
      %p247 = scmp.eq.s32.totalorder %s22, 1
      %p248 = por %p246, %p247
      %p249 = scmp.ne.s32.totalorder %s238, %s239
      %p250 = scmp.eq.s32.totalorder %s22, 0
      %p251 = por %p249, %p250
      %p252 = scmp.ne.s32.totalorder %s238, %s239
      %p253 = scmp.eq.s32.totalorder %s23, 1
      %p254 = por %p252, %p253
      %p256 = scmp.ne.s32.totalorder %s239, %s255
      %p257 = scmp.eq.s32.totalorder %s23, 0
      %p258 = por %p256, %p257
      %p259 = scmp.le.s32.totalorder 1, %s17
      %p260 = scmp.lt.s32.totalorder %s17, 3
      %p261 = pnand %p259, %p260
      %p262 = pneg %p261
      // Predicated region
      $region9: #{tpu_custom_call.1} parent=5 // pred_check
        _
      $region10: #{tpu_custom_call.1} parent=5 // pred_check_branch
        %264 = sbr.rel (%p261) target = $region12
      $region11: #{tpu_custom_call.1} parent=5 // pred_region
        %s265 = ssub.s32 %s17, 1
      $region12: #{tpu_custom_call.1} parent=5 // pred_fallthru
        _
      %p266 = scmp.lt.s32.totalorder %s17, 2
      // Predicated region
      $region13: #{tpu_custom_call.1} parent=5 // pred_check
        %p267 = pneg %p266
      $region14: #{tpu_custom_call.1} parent=5 // pred_check_branch
        %269 = sbr.rel (%p267) target = $region16
      $region15: #{tpu_custom_call.1} parent=5 // pred_region
        // Predicated region
        $region17: #{tpu_custom_call.1} parent=15 // pred_check
          %p270 = pneg %p37
        $region18: #{tpu_custom_call.1} parent=15 // pred_check_branch
          %272 = sbr.rel (%p270) target = $region20
        $region19: #{tpu_custom_call.1} parent=15 // pred_region
          %p273 = scmp.lt.s32.totalorder %s17, 1
          %s274 = scalar_select %p273, %s17, 1
          %s275 = smul.addr %s274, 4
          %s276 = smul.addr %s275, 8
          %s277 = scalar_lea.vmem %s0, %s276
        $region20: #{tpu_custom_call.1} parent=15 // pred_fallthru
          _
        // Predicated region
        $region21: #{tpu_custom_call.1} parent=15 // pred_check
          %p278 = pneg %p63
        $region22: #{tpu_custom_call.1} parent=15 // pred_check_branch
          %280 = sbr.rel (%p278) target = $region24
        $region23: #{tpu_custom_call.1} parent=15 // pred_region
          %p281 = scmp.lt.s32.totalorder %s17, 1
          %s282 = scalar_select %p281, %s17, 1
          %s283 = smul.addr %s282, 2
          %s284 = scalar_lea.vmem %s1, %s283
        $region24: #{tpu_custom_call.1} parent=15 // pred_fallthru
          _
        // Predicated region
        $region25: #{tpu_custom_call.1} parent=15 // pred_check
          %p285 = pneg %p89
        $region26: #{tpu_custom_call.1} parent=15 // pred_check_branch
          %287 = sbr.rel (%p285) target = $region28
        $region27: #{tpu_custom_call.1} parent=15 // pred_region
          %p288 = scmp.lt.s32.totalorder %s17, 1
          %s289 = scalar_select %p288, %s17, 1
          %s290 = smul.addr %s289, 4
          %s291 = smul.addr %s290, 8
          %s292 = scalar_lea.vmem %s2, %s291
        $region28: #{tpu_custom_call.1} parent=15 // pred_fallthru
          _
        // Predicated region
        $region29: #{tpu_custom_call.1} parent=15 // pred_check
          %p293 = pneg %p115
        $region30: #{tpu_custom_call.1} parent=15 // pred_check_branch
          %295 = sbr.rel (%p293) target = $region32
        $region31: #{tpu_custom_call.1} parent=15 // pred_region
          %p296 = scmp.lt.s32.totalorder %s17, 1
          %s297 = scalar_select %p296, %s17, 1
          %s298 = scalar_lea.vmem %s3, %s297
        $region32: #{tpu_custom_call.1} parent=15 // pred_fallthru
          _
        // Predicated region
        $region33: #{tpu_custom_call.1} parent=15 // pred_check
          %p299 = pneg %p141
        $region34: #{tpu_custom_call.1} parent=15 // pred_check_branch
          %301 = sbr.rel (%p299) target = $region36
        $region35: #{tpu_custom_call.1} parent=15 // pred_region
          %p302 = scmp.lt.s32.totalorder %s17, 1
          %s303 = scalar_select %p302, %s17, 1
          %s304 = smul.addr %s303, 8
          %s305 = smul.addr %s304, 8
          %s306 = scalar_lea.vmem %s4, %s305
        $region36: #{tpu_custom_call.1} parent=15 // pred_fallthru
          _
        // Predicated region
        $region37: #{tpu_custom_call.1} parent=15 // pred_check
          %p307 = pneg %p167
        $region38: #{tpu_custom_call.1} parent=15 // pred_check_branch
          %309 = sbr.rel (%p307) target = $region40
        $region39: #{tpu_custom_call.1} parent=15 // pred_region
          %p310 = scmp.lt.s32.totalorder %s17, 1
          %s311 = scalar_select %p310, %s17, 1
          %s312 = scalar_lea.vmem %s5, %s311
        $region40: #{tpu_custom_call.1} parent=15 // pred_fallthru
          _
        // Predicated region
        $region41: #{tpu_custom_call.1} parent=15 // pred_check
          %p313 = pneg %p193
        $region42: #{tpu_custom_call.1} parent=15 // pred_check_branch
          %315 = sbr.rel (%p313) target = $region44
        $region43: #{tpu_custom_call.1} parent=15 // pred_region
          %p316 = scmp.lt.s32.totalorder %s17, 1
          %s317 = scalar_select %p316, %s17, 1
          %s318 = smul.addr %s317, 16
          %s319 = smul.addr %s318, 8
          %s320 = scalar_lea.vmem %s6, %s319
        $region44: #{tpu_custom_call.1} parent=15 // pred_fallthru
          _
        // Predicated region
        $region45: #{tpu_custom_call.1} parent=15 // pred_check
          %p321 = pneg %p219
        $region46: #{tpu_custom_call.1} parent=15 // pred_check_branch
          %323 = sbr.rel (%p321) target = $region48
        $region47: #{tpu_custom_call.1} parent=15 // pred_region
          %p324 = scmp.lt.s32.totalorder %s17, 1
          %s325 = scalar_select %p324, %s17, 1
          %s326 = scalar_lea.vmem %s7, %s325
        $region48: #{tpu_custom_call.1} parent=15 // pred_fallthru
          _
      $region16: #{tpu_custom_call.1} parent=5 // pred_fallthru
        _
      %p327 = scmp.le.s32.totalorder 1, %s17
      %p328 = scmp.lt.s32.totalorder %s17, 3
      %p329 = pnand %p327, %p328
      %p330 = pneg %p329
      // Predicated region
      $region49: #{tpu_custom_call.1} parent=5 // pred_check
        _
      $region50: #{tpu_custom_call.1} parent=5 // pred_check_branch
        %332 = sbr.rel (%p329) target = $region52
      $region51: #{tpu_custom_call.1} parent=5 // pred_region
        %s333 = ssub.s32 %s17, 1
        %p334 = scmp.lt.s32.totalorder %s22, 1
        %s335 = scalar_select %p334, %s22, 1
        %s336 = smul.addr %s335, 4
        %s337 = smul.addr %s336, 8
        %s338 = scalar_lea.vmem %s0, %s337
        %p339 = pneg %p43
        %p340 = pneg %p40
        %p341 = scmp.lt.s32.totalorder %s22, 1
        %s342 = scalar_select %p341, %s22, 1
        %s343 = smul.addr %s342, 2
        %s344 = scalar_lea.vmem %s1, %s343
        %p345 = pneg %p69
        %p346 = pneg %p66
        %p347 = scmp.lt.s32.totalorder %s22, 1
        %s348 = scalar_select %p347, %s22, 1
        %s349 = smul.addr %s348, 4
        %s350 = smul.addr %s349, 8
        %s351 = scalar_lea.vmem %s2, %s350
        %p352 = pneg %p95
        %p353 = pneg %p92
        %p354 = scmp.lt.s32.totalorder %s22, 1
        %s355 = scalar_select %p354, %s22, 1
        %s356 = scalar_lea.vmem %s3, %s355
        %p357 = pneg %p121
        %p358 = pneg %p118
        %p359 = scmp.lt.s32.totalorder %s22, 1
        %s360 = scalar_select %p359, %s22, 1
        %s361 = smul.addr %s360, 8
        %s362 = smul.addr %s361, 8
        %s363 = scalar_lea.vmem %s4, %s362
        %p364 = pneg %p147
        %p365 = pneg %p144
        %p366 = scmp.lt.s32.totalorder %s22, 1
        %s367 = scalar_select %p366, %s22, 1
        %s368 = scalar_lea.vmem %s5, %s367
        %p369 = pneg %p173
        %p370 = pneg %p170
        %p371 = scmp.lt.s32.totalorder %s22, 1
        %s372 = scalar_select %p371, %s22, 1
        %s373 = smul.addr %s372, 16
        %s374 = smul.addr %s373, 8
        %s375 = scalar_lea.vmem %s6, %s374
        %p376 = pneg %p199
        %p377 = pneg %p196
        %p378 = scmp.lt.s32.totalorder %s22, 1
        %s379 = scalar_select %p378, %s22, 1
        %s380 = scalar_lea.vmem %s7, %s379
        %p381 = pneg %p225
        %p382 = pneg %p222
        %p383 = pneg %p251
        %p384 = pneg %p248
        %s385 = sand.u32 %s238, 1
        %s386 = scalar_lea.sflag [#allocation3], %s385
        %s387 = sand.u32 %s238, 1
        %s388 = smul.addr %s387, 8
        %s389 = scalar_lea.vmem [#allocation2], %s388
        %p390 = scmp.lt.s32.totalorder %s22, 1
        %s391 = scalar_select %p390, %s22, 1
        %s392 = smul.addr %s391, 4
        %s393 = smul.addr %s392, 8
        %s394 = scalar_lea.vmem %s0, %s393
        %p395 = scmp.lt.s32.totalorder %s22, 1
        %s396 = scalar_select %p395, %s22, 1
        %s397 = smul.addr %s396, 2
        %s398 = scalar_lea.vmem %s1, %s397
        %p399 = scmp.lt.s32.totalorder %s22, 1
        %s400 = scalar_select %p399, %s22, 1
        %s401 = smul.addr %s400, 4
        %s402 = smul.addr %s401, 8
        %s403 = scalar_lea.vmem %s2, %s402
        %p404 = scmp.lt.s32.totalorder %s22, 1
        %s405 = scalar_select %p404, %s22, 1
        %s406 = scalar_lea.vmem %s3, %s405
        %p407 = scmp.lt.s32.totalorder %s22, 1
        %s408 = scalar_select %p407, %s22, 1
        %s409 = smul.addr %s408, 8
        %s410 = smul.addr %s409, 8
        %s411 = scalar_lea.vmem %s4, %s410
        %p412 = scmp.lt.s32.totalorder %s22, 1
        %s413 = scalar_select %p412, %s22, 1
        %s414 = scalar_lea.vmem %s5, %s413
        %p415 = scmp.lt.s32.totalorder %s22, 1
        %s416 = scalar_select %p415, %s22, 1
        %s417 = smul.addr %s416, 16
        %s418 = smul.addr %s417, 8
        %s419 = scalar_lea.vmem %s6, %s418
        %p420 = scmp.lt.s32.totalorder %s22, 1
        %s421 = scalar_select %p420, %s22, 1
        %s422 = scalar_lea.vmem %s7, %s421
        %v423 = vld [vmem:[%s394] sm:$0xff]
        %v424 = vld [vmem:[%s394 + $0x8] sm:$0xff]
        %v425 = vld [vmem:[%s394 + $0x10] sm:$0xff]
        %v426 = vld [vmem:[%s394 + $0x18] sm:$0xff]
        %v427 = vld [vmem:[%s398] sm:$0x3]
        %v429 = vperm.slane %v427, 0
        %v430 = vperm.slane %v427, 1
        %433 = vmatpush.xpose.msra.mxu0 0.0
        %434 = vmatpush.xpose.msra.mxu0 0.0
        %435 = vmatpush.xpose.msra.mxu0 0.0
        %436 = vmatpush.xpose.msra.mxu0 0.0
        %437 = vmatpush.xpose.msra.mxu0 0.0
        %438 = vmatpush.xpose.msra.mxu0 0.0
        %439 = vmatpush.xpose.msra.mxu0 0.0
        %440 = vmatpush.xpose.msra.mxu0 0.0
        %441 = vmatpush.xpose.msra.mxu0 0.0
        %442 = vmatpush.xpose.msra.mxu0 0.0
        %443 = vmatpush.xpose.msra.mxu0 0.0
        %444 = vmatpush.xpose.msra.mxu0 0.0
        %445 = vmatpush.xpose.msra.mxu0 0.0
        %446 = vmatpush.xpose.msra.mxu0 0.0
        %447 = vmatpush.xpose.msra.mxu0 %v425
        %448 = vmatpush.xpose.msra.mxu0 %v423
        %449 = vmatmul.f32.gmra.mxu0 %v429
        %v450 = vpop.f32.mrf.mxu0
        %v451 = vadd.f32 0.0, %v450
        %452 = vdwg.mxu0
        %453 = vmatpush.xpose.msra.mxu0 0.0
        %454 = vmatpush.xpose.msra.mxu0 0.0
        %455 = vmatpush.xpose.msra.mxu0 0.0
        %456 = vmatpush.xpose.msra.mxu0 0.0
        %457 = vmatpush.xpose.msra.mxu0 0.0
        %458 = vmatpush.xpose.msra.mxu0 0.0
        %459 = vmatpush.xpose.msra.mxu0 0.0
        %460 = vmatpush.xpose.msra.mxu0 0.0
        %461 = vmatpush.xpose.msra.mxu0 0.0
        %462 = vmatpush.xpose.msra.mxu0 0.0
        %463 = vmatpush.xpose.msra.mxu0 0.0
        %464 = vmatpush.xpose.msra.mxu0 0.0
        %465 = vmatpush.xpose.msra.mxu0 0.0
        %466 = vmatpush.xpose.msra.mxu0 0.0
        %467 = vmatpush.xpose.msra.mxu0 %v426
        %468 = vmatpush.xpose.msra.mxu0 %v424
        %469 = vmatmul.f32.gmra.mxu0 %v430
        %v470 = vpop.f32.mrf.mxu0
        %v471 = vadd.f32 %v451, %v470
        %472 = vdwg.mxu0
        %v473 = vmul.f32 %v471, %v471
        %vm474 = vcmask 122880
        %v475 = vsel %vm474, %v473, 0.0
        %476 = vadd.xlane.f32.xlu0 %v475
        %v477 = vpop.xlane.xlu0 %476
        %v478 = vrot.slane %v477, 4
        %v479 = vadd.f32 %v477, %v478
        %v480 = vrot.slane %v479, 2
        %v481 = vadd.f32 %v479, %v480
        %v482 = vrot.slane %v481, 1
        %v483 = vadd.f32 %v481, %v482
        %s484 = vtos %v483
        %s485 = smul.f32 %s484, 0.03125
        %s486 = sadd.f32 %s485, 0.0
        %v487 = vld [vmem:[%s403] sm:$0xff]
        %v488 = vld [vmem:[%s403 + $0x8] sm:$0xff]
        %v489 = vld [vmem:[%s403 + $0x10] sm:$0xff]
        %v490 = vld [vmem:[%s403 + $0x18] sm:$0xff]
        %v491 = vld [vmem:[%s406] sm:$0x1]
        %vm492 = vcmask 523264
        %v494 = vsel %vm492, %v491, 0
        %v497 = vsel %vm492, %v487, 0
        %v500 = vsel %vm492, %v488, 0
        %v503 = vsel %vm492, %v489, 0
        %v506 = vsel %vm492, %v490, 0
        %508 = vmatpush.xpose.msra.mxu0 0.0
        %509 = vmatpush.xpose.msra.mxu0 0.0
        %510 = vmatpush.xpose.msra.mxu0 0.0
        %511 = vmatpush.xpose.msra.mxu0 0.0
        %512 = vmatpush.xpose.msra.mxu0 0.0
        %513 = vmatpush.xpose.msra.mxu0 0.0
        %514 = vmatpush.xpose.msra.mxu0 0.0
        %515 = vmatpush.xpose.msra.mxu0 0.0
        %516 = vmatpush.xpose.msra.mxu0 0.0
        %517 = vmatpush.xpose.msra.mxu0 0.0
        %518 = vmatpush.xpose.msra.mxu0 0.0
        %519 = vmatpush.xpose.msra.mxu0 0.0
        %520 = vmatpush.xpose.msra.mxu0 %v506
        %521 = vmatpush.xpose.msra.mxu0 %v503
        %522 = vmatpush.xpose.msra.mxu0 %v500
        %523 = vmatpush.xpose.msra.mxu0 %v497
        %524 = vmatmul.f32.gmra.mxu0 %v494
        %v525 = vpop.f32.mrf.mxu0
        %v526 = vadd.f32 0.0, %v525
        %527 = vdwg.mxu0
        %v528 = vmul.f32 %v526, %v526
        %vm529 = vcmask 253952
        %v530 = vsel %vm529, %v528, 0.0
        %531 = vadd.xlane.f32.xlu0 %v530
        %v532 = vpop.xlane.xlu0 %531
        %v533 = vrot.slane %v532, 4
        %v534 = vadd.f32 %v532, %v533
        %v535 = vrot.slane %v534, 2
        %v536 = vadd.f32 %v534, %v535
        %v537 = vrot.slane %v536, 1
        %v538 = vadd.f32 %v536, %v537
        %s539 = vtos %v538
        %s540 = smul.f32 %s539, 0.015625
        %s541 = sadd.f32 %s486, %s540
        %v542 = vld [vmem:[%s411] sm:$0xff]
        %v543 = vld [vmem:[%s411 + $0x8] sm:$0xff]
        %v544 = vld [vmem:[%s411 + $0x10] sm:$0xff]
        %v545 = vld [vmem:[%s411 + $0x18] sm:$0xff]
        %v546 = vld [vmem:[%s411 + $0x20] sm:$0xff]
        %v547 = vld [vmem:[%s411 + $0x28] sm:$0xff]
        %v548 = vld [vmem:[%s411 + $0x30] sm:$0xff]
        %v549 = vld [vmem:[%s411 + $0x38] sm:$0xff]
        %v550 = vld [vmem:[%s414] sm:$0x1]
        %vm551 = vcmask 130048
        %v553 = vsel %vm551, %v550, 0
        %v556 = vsel %vm551, %v542, 0
        %v559 = vsel %vm551, %v543, 0
        %v562 = vsel %vm551, %v544, 0
        %v565 = vsel %vm551, %v545, 0
        %v568 = vsel %vm551, %v546, 0
        %v571 = vsel %vm551, %v547, 0
        %v574 = vsel %vm551, %v548, 0
        %v577 = vsel %vm551, %v549, 0
        %579 = vmatpush.xpose.msra.mxu0 0.0
        %580 = vmatpush.xpose.msra.mxu0 0.0
        %581 = vmatpush.xpose.msra.mxu0 0.0
        %582 = vmatpush.xpose.msra.mxu0 0.0
        %583 = vmatpush.xpose.msra.mxu0 0.0
        %584 = vmatpush.xpose.msra.mxu0 0.0
        %585 = vmatpush.xpose.msra.mxu0 0.0
        %586 = vmatpush.xpose.msra.mxu0 0.0
        %587 = vmatpush.xpose.msra.mxu0 %v577
        %588 = vmatpush.xpose.msra.mxu0 %v574
        %589 = vmatpush.xpose.msra.mxu0 %v571
        %590 = vmatpush.xpose.msra.mxu0 %v568
        %591 = vmatpush.xpose.msra.mxu0 %v565
        %592 = vmatpush.xpose.msra.mxu0 %v562
        %593 = vmatpush.xpose.msra.mxu0 %v559
        %594 = vmatpush.xpose.msra.mxu0 %v556
        %595 = vmatmul.f32.gmra.mxu0 %v553
        %v596 = vpop.f32.mrf.mxu0
        %v597 = vadd.f32 0.0, %v596
        %598 = vdwg.mxu0
        %v599 = vmul.f32 %v597, %v597
        %vm600 = vcmask 516096
        %v601 = vsel %vm600, %v599, 0.0
        %602 = vadd.xlane.f32.xlu0 %v601
        %v603 = vpop.xlane.xlu0 %602
        %v604 = vrot.slane %v603, 4
        %v605 = vadd.f32 %v603, %v604
        %v606 = vrot.slane %v605, 2
        %v607 = vadd.f32 %v605, %v606
        %v608 = vrot.slane %v607, 1
        %v609 = vadd.f32 %v607, %v608
        %s610 = vtos %v609
        %s611 = smul.f32 %s610, 0.0078125
        %s612 = sadd.f32 %s541, %s611
        %v613 = vld [vmem:[%s419] sm:$0xff]
        %v614 = vld [vmem:[%s419 + $0x8] sm:$0xff]
        %v615 = vld [vmem:[%s419 + $0x10] sm:$0xff]
        %v616 = vld [vmem:[%s419 + $0x18] sm:$0xff]
        %v617 = vld [vmem:[%s419 + $0x20] sm:$0xff]
        %v618 = vld [vmem:[%s419 + $0x28] sm:$0xff]
        %v619 = vld [vmem:[%s419 + $0x30] sm:$0xff]
        %v620 = vld [vmem:[%s419 + $0x38] sm:$0xff]
        %v621 = vld [vmem:[%s419 + $0x40] sm:$0xff]
        %v622 = vld [vmem:[%s419 + $0x48] sm:$0xff]
        %v623 = vld [vmem:[%s419 + $0x50] sm:$0xff]
        %v624 = vld [vmem:[%s419 + $0x58] sm:$0xff]
        %v625 = vld [vmem:[%s419 + $0x60] sm:$0xff]
        %v626 = vld [vmem:[%s419 + $0x68] sm:$0xff]
        %v627 = vld [vmem:[%s419 + $0x70] sm:$0xff]
        %v628 = vld [vmem:[%s419 + $0x78] sm:$0xff]
        %v629 = vld [vmem:[%s422] sm:$0x1]
        %vm630 = vcmask 31744
        %v632 = vsel %vm630, %v629, 0
        %v635 = vsel %vm630, %v613, 0
        %v638 = vsel %vm630, %v614, 0
        %v641 = vsel %vm630, %v615, 0
        %v644 = vsel %vm630, %v616, 0
        %v647 = vsel %vm630, %v617, 0
        %v650 = vsel %vm630, %v618, 0
        %v653 = vsel %vm630, %v619, 0
        %v656 = vsel %vm630, %v620, 0
        %v659 = vsel %vm630, %v621, 0
        %v662 = vsel %vm630, %v622, 0
        %v665 = vsel %vm630, %v623, 0
        %v668 = vsel %vm630, %v624, 0
        %v671 = vsel %vm630, %v625, 0
        %v674 = vsel %vm630, %v626, 0
        %v677 = vsel %vm630, %v627, 0
        %v680 = vsel %vm630, %v628, 0
        %682 = vmatpush.xpose.msra.mxu0 %v680
        %683 = vmatpush.xpose.msra.mxu0 %v677
        %684 = vmatpush.xpose.msra.mxu0 %v674
        %685 = vmatpush.xpose.msra.mxu0 %v671
        %686 = vmatpush.xpose.msra.mxu0 %v668
        %687 = vmatpush.xpose.msra.mxu0 %v665
        %688 = vmatpush.xpose.msra.mxu0 %v662
        %689 = vmatpush.xpose.msra.mxu0 %v659
        %690 = vmatpush.xpose.msra.mxu0 %v656
        %691 = vmatpush.xpose.msra.mxu0 %v653
        %692 = vmatpush.xpose.msra.mxu0 %v650
        %693 = vmatpush.xpose.msra.mxu0 %v647
        %694 = vmatpush.xpose.msra.mxu0 %v644
        %695 = vmatpush.xpose.msra.mxu0 %v641
        %696 = vmatpush.xpose.msra.mxu0 %v638
        %697 = vmatpush.xpose.msra.mxu0 %v635
        %698 = vmatmul.f32.gmra.mxu0 %v632
        %v699 = vpop.f32.mrf.mxu0
        %v700 = vadd.f32 0.0, %v699
        %701 = vdwg.mxu0
        %v702 = vmul.f32 %v700, %v700
        %vm703 = vcmask 1040384
        %v704 = vsel %vm703, %v702, 0.0
        %705 = vadd.xlane.f32.xlu0 %v704
        %v706 = vpop.xlane.xlu0 %705
        %v707 = vrot.slane %v706, 4
        %v708 = vadd.f32 %v706, %v707
        %v709 = vrot.slane %v708, 2
        %v710 = vadd.f32 %v708, %v709
        %v711 = vrot.slane %v710, 1
        %v712 = vadd.f32 %v710, %v711
        %s713 = vtos %v712
        %s714 = smul.f32 %s713, 0.00390625
        %s715 = sadd.f32 %s612, %s714
        %v716 = vstv %s715
        %717 = vst [vmem:[%s389] sm:$0xff] %v716
        %s718 = sand.u32 %s238, 1
        %s719 = scalar_lea.sflag [#allocation3], %s718
        %s720 = sand.u32 %s238, 1
        %s721 = smul.addr %s720, 8
        %s722 = scalar_lea.vmem [#allocation2], %s721
        // Predicated region
        $region53: #{tpu_custom_call.1} parent=51 // pred_check
          %p723 = pneg %p248
        $region54: #{tpu_custom_call.1} parent=51 // pred_check_branch
          %725 = sbr.rel (%p723) target = $region56
        $region55: #{tpu_custom_call.1} parent=51 // pred_region
          %727 = vsyncadd %s719, 0
          %s728 = smul.addr %s22, 8
          %s729 = scalar_lea.hbm %s8, %s728
          %s731 = sshll.u32 %s722, 4
          %s732 = int_to_ptr.vmem [resolvable:$true] %s731
          %s733 = sshll.u32 %s729, 4
          %s734 = int_to_ptr.hbm [resolvable:$true] %s733
          %736 = dma.vmem_to_hbm [thread:$0]  %s732, 128, %s734, %s719
        $region56: #{tpu_custom_call.1} parent=51 // pred_fallthru
          _
      $region52: #{tpu_custom_call.1} parent=5 // pred_fallthru
        _
      %p737 = scmp.le.s32.totalorder 2, %s17
      // Predicated region
      $region57: #{tpu_custom_call.1} parent=5 // pred_check
        %p738 = pneg %p737
      $region58: #{tpu_custom_call.1} parent=5 // pred_check_branch
        %740 = sbr.rel (%p738) target = $region60
      $region59: #{tpu_custom_call.1} parent=5 // pred_region
        %s741 = ssub.s32 %s17, 2
        // Predicated region
        $region61: #{tpu_custom_call.1} parent=59 // pred_check
          %p742 = pneg %p254
        $region62: #{tpu_custom_call.1} parent=59 // pred_check_branch
          %744 = sbr.rel (%p742) target = $region64
        $region63: #{tpu_custom_call.1} parent=59 // pred_region
          %s745 = sand.u32 %s239, 1
          %s746 = scalar_lea.sflag [#allocation3], %s745
          %s747 = sand.u32 %s239, 1
          %s748 = smul.addr %s747, 8
          %s749 = scalar_lea.vmem [#allocation2], %s748
          %751 = dma.done %s746, 128
        $region64: #{tpu_custom_call.1} parent=59 // pred_fallthru
          _
      $region60: #{tpu_custom_call.1} parent=5 // pred_fallthru
        _
    $region6: #{tpu_custom_call.1} parent=1 // loop_footer
      %s21 = sadd.s32 1, %s17
    $region7: #{tpu_custom_call.1} parent=1 // loop_footer_branch
      %16 = sbr.rel target = $region3
    $region8: #{tpu_custom_call.1} parent=1 // loop_exit
      _
    %752 = vsyncpa [#allocation3], 1
    %s753 = scalar_lea.sflag [#allocation3], 1
    %754 = vsyncpa %s753, 1

</llo_original>
